<compile_context>
chip_gen: v6e
topology: v6e:2x2x1
jax: 0.10.0
libtpu: 0.0.40
codegen_flags: <defaults>
</compile_context>

<pallas_src>
import functools

import numpy as np
import jax
import jax.numpy as jnp
from jax import lax
from jax.experimental import pallas as pl
from jax.experimental.pallas import tpu as pltpu


_PIPELINE_BYTES = 8 * 1024 * 1024   # budget for 2 inputs x 2 pipeline buffers


def _round_up(x, m):
    return ((x + m - 1) // m) * m


@functools.lru_cache(maxsize=None)
def _build_loss_fn(B, D1, D2, x_dtype_name, has_anom):
    """Build (and cache) a jitted loss fn for a given shape/dtype/branch."""
    F = D1 * D2
    inv_f = 1.0 / float(F)
    itemsize = jnp.dtype(x_dtype_name).itemsize

    # Batch tile: 2 inputs x 2 pipeline buffers x (TB*F*itemsize) within ~8 MiB.
    bytes_per_row = 4 * F * itemsize
    tb_cap = max(8, (_PIPELINE_BYTES // bytes_per_row) // 8 * 8)
    TB = min(_round_up(B, 8), tb_cap)
    nb = -(-B // TB)                    # ceil-div; last tile may be ragged
    B_grid = nb * TB
    ragged = (B_grid != B)

    # Epilogue strip: S anomaly rows x B_ep lanes per step.  S=128 keeps every
    # strip temporary <= ~B_ep*512 bytes and makes the lane-dense err-row
    # stores 128-aligned (or full-width when n_strips == 1).
    S = min(128, B_grid)
    B_ep = _round_up(B_grid, S)
    n_strips = B_ep // S

    def kernel(y_col_ref, y_row_ref, xh_ref, xt_ref, pair_ref, sum_ref,
               err_col, err_row):
        i = pl.program_id(0)

        @pl.when(i == 0)
        def _init():
            # Only rows in [B_grid, B_ep) are never written by a tile; cheap
            # to zero the whole thing once so the final sums are exact.
            err_col[...] = jnp.zeros_like(err_col)

        # ---- bulk phase: per-sample MSE for this batch tile (HBM-bound) ----
        d = xh_ref[...].astype(jnp.float32) - xt_ref[...].astype(jnp.float32)
        if ragged:
            # Mask rows past B (ragged last tile: OOB reads are garbage).
            grow = lax.broadcasted_iota(jnp.int32, (TB, 1), 0) + i * TB
            d = jnp.where(grow < B, d, 0.0)
        tile_err = jnp.sum(d * d, axis=1, keepdims=True) * inv_f       # (TB,1)
        err_col[pl.ds(pl.multiple_of(i * TB, TB), TB), :] = tile_err

        # ---- epilogue on the last tile: total err + pairwise AUC term ----
        @pl.when(i == nb - 1)
        def _epilogue():
            sum_ref[0, 0] = jnp.sum(err_col[...])      # padded rows are 0

            # Lane-dense err row (err_row[0, j] = err[j]) via an XLU sublane
            # reduce of eye_S * err_col, built strip by strip with STATIC
            # offsets (128-aligned, or the full row when n_strips == 1).
            eye_s = (lax.broadcasted_iota(jnp.int32, (S, S), 0) ==
                     lax.broadcasted_iota(jnp.int32, (S, S), 1)
                     ).astype(jnp.float32)
            for s in range(n_strips):
                e_i = err_col[s * S:(s + 1) * S, :]                    # (S,1)
                err_row[:, s * S:(s + 1) * S] = jnp.sum(
                    eye_s * e_i, axis=0, keepdims=True)                # (1,S)

            err_j = err_row[...]                    # (1, B_ep): err[j]
            mn_row = y_row_ref[...] == 1            # normals along lanes

            def strip_body(s, acc):
                off = pl.multiple_of(s * S, S)
                e_i = err_col[pl.ds(off, S), :]                    # (S,1)
                ma = y_col_ref[pl.ds(off, S), :] > 1               # anomalies
                # sigmoid via tanh: stable and rides the EUP (no VPU divide).
                sig = 0.5 * (jnp.tanh(0.5 * (e_i - err_j)) + 1.0)  # (S,B_ep)
                keep = jnp.logical_and(ma, mn_row)
                return acc + jnp.sum(jnp.where(keep, sig, 0.0))

            pair_ref[0, 0] = lax.fori_loop(0, n_strips, strip_body,
                                           jnp.float32(0.0))

    pallas_fn = pl.pallas_call(
        kernel,
        out_shape=(jax.ShapeDtypeStruct((1, 1), jnp.float32),    # pair sum
                   jax.ShapeDtypeStruct((1, 1), jnp.float32)),   # err sum
        grid=(nb,),
        in_specs=[
            pl.BlockSpec((B_ep, 1), lambda i: (0, 0)),           # y column
            pl.BlockSpec((1, B_ep), lambda i: (0, 0)),           # y row
            pl.BlockSpec((TB, F), lambda i: (i, 0)),             # x_hat tile
            pl.BlockSpec((TB, F), lambda i: (i, 0)),             # x_true tile
        ],
        out_specs=(pl.BlockSpec(memory_space=pltpu.MemorySpace.SMEM),
                   pl.BlockSpec(memory_space=pltpu.MemorySpace.SMEM)),
        scratch_shapes=[pltpu.VMEM((B_ep, 1), jnp.float32),      # err column
                        pltpu.VMEM((1, B_ep), jnp.float32)],     # err row
        compiler_params=pltpu.CompilerParams(
            # err scratch is carried across batch tiles + last-step epilogue,
            # so the batch axis must stay sequential ("arbitrary").
            dimension_semantics=("arbitrary",),
            vmem_limit_bytes=32 * 1024 * 1024),
    )

    def device_fn(x_hat, x_true, y, lambda_auc, denom):
        xh = x_hat.reshape(B, F)        # native dtype: cast happens in-kernel
        xt = x_true.reshape(B, F)
        y32 = jnp.asarray(y, jnp.int32).reshape(B)
        y_pad = jnp.pad(y32, (0, B_ep - B))   # labels only (tiny); activations
        pair, esum = pallas_fn(y_pad.reshape(B_ep, 1),   # are never padded.
                               y_pad.reshape(1, B_ep), xh, xt)
        mean_loss = esum[0, 0] / B
        if has_anom:
            # Matches PyTorch semantics, including the n_n == 0 hazard
            # (denom == 0 -> inf/nan on device, like torch's tensor / 0).
            auc = lambda_auc * pair[0, 0] / denom
            return mean_loss + auc, mean_loss
        return mean_loss

    return jax.jit(device_fn)


def mse_auc_loss(x_hat, x_true, y, lambda_auc, *, n_a=None, n_n=None):
    """Pallas TPU implementation of MSEAUC_approx(x_hat, x_true, y, lambda_auc).

    Pass n_a / n_n (host ints) to avoid any device->host sync on y; if omitted
    they are derived with np.asarray(y) (sync-free when y is already numpy).
    """
    B, D1, D2 = x_hat.shape
    if n_a is None or n_n is None:
        y_host = np.asarray(y)
        n_a = int((y_host > 1).sum())
        n_n = int((y_host == 1).sum())
    has_anom = n_a > 0
    fn = _build_loss_fn(int(B), int(D1), int(D2),
                        jnp.dtype(x_hat.dtype).name, bool(has_anom))
    denom = float(n_a * n_n)
    return fn(x_hat, x_true, y, lambda_auc, denom)


def _reference(x_hat, x_true, y, lambda_auc):
    """Pure-JAX reference mirroring the PyTorch code."""
    err = jnp.mean((x_hat - x_true) ** 2, axis=(1, 2))
    err_n = err[y == 1]
    err_a = err[y > 1]
    n_a, n_n = err_a.shape[0], err_n.shape[0]
    mean_loss = err.mean()
    if n_a > 0:
        diff = err_a.reshape(-1, 1)[:, :, None] - err_n.reshape(-1, 1)
        auc = lambda_auc * jax.nn.sigmoid(diff).sum() / (n_a * n_n)
        return mean_loss + auc, mean_loss
    return mean_loss


if __name__ == "__main__":
    key = jax.random.PRNGKey(0)
    k1, k2, k3, k4 = jax.random.split(key, 4)
    lam = 0.5

    # Case 1: mixed labels -> (penalized_loss, mean_loss), B divides the tile.
    B, D1, D2 = 8, 16, 16
    x_hat = jax.random.normal(k1, (B, D1, D2), dtype=jnp.float32)
    x_true = jax.random.normal(k2, (B, D1, D2), dtype=jnp.float32)
    y = jnp.array([1, 2, 1, 1, 2, 1, 2, 1], dtype=jnp.int32)   # 1 normal, >1 anomaly
    pen, mean = jax.block_until_ready(mse_auc_loss(x_hat, x_true, y, lam))
    ref_pen, ref_mean = _reference(x_hat, x_true, y, lam)
    assert jnp.allclose(pen, ref_pen, atol=1e-5, rtol=1e-5), (pen, ref_pen)
    assert jnp.allclose(mean, ref_mean, atol=1e-5, rtol=1e-5), (mean, ref_mean)

    # Case 2: all-normal labels -> scalar mean loss (like the PyTorch module).
    y_norm = jnp.ones((B,), dtype=jnp.int32)
    mean_only = jax.block_until_ready(mse_auc_loss(x_hat, x_true, y_norm, lam))
    ref_mean_only = _reference(x_hat, x_true, y_norm, lam)
    assert jnp.allclose(mean_only, ref_mean_only, atol=1e-5, rtol=1e-5), (
        mean_only, ref_mean_only)

    # Case 3: ragged batch (B not a multiple of the tile) exercises the
    # in-kernel row masking (no host-side activation padding anymore).
    B2 = 11
    xh2 = jax.random.normal(k3, (B2, D1, D2), dtype=jnp.float32)
    xt2 = jax.random.normal(k4, (B2, D1, D2), dtype=jnp.float32)
    y2 = jnp.array([1, 2, 1, 3, 1, 1, 2, 1, 1, 5, 1], dtype=jnp.int32)
    pen2, mean2 = jax.block_until_ready(mse_auc_loss(xh2, xt2, y2, lam))
    rp2, rm2 = _reference(xh2, xt2, y2, lam)
    assert jnp.allclose(pen2, rp2, atol=1e-5, rtol=1e-5), (pen2, rp2)
    assert jnp.allclose(mean2, rm2, atol=1e-5, rtol=1e-5), (mean2, rm2)

    print("KERNEL_OK")
</pallas_src>

<mosaic_0001>
module attributes {stable_mosaic.version = 11 : i64} {
  func.func @kernel(%arg0: i32, %arg1: memref<8x1xi32, #tpu.memory_space<vmem>>, %arg2: memref<1x8xi32, #tpu.memory_space<vmem>>, %arg3: memref<8x256xf32, #tpu.memory_space<vmem>>, %arg4: memref<8x256xf32, #tpu.memory_space<vmem>>, %arg5: memref<1x1xf32, #tpu.memory_space<smem>>, %arg6: memref<1x1xf32, #tpu.memory_space<smem>>, %arg7: memref<8x1xf32, #tpu.memory_space<vmem>>, %arg8: memref<1x8xf32, #tpu.memory_space<vmem>>) attributes {dimension_semantics = [#tpu.dimension_semantics<arbitrary>], iteration_bounds = array<i64: 1>, scalar_prefetch = 0 : i64, scratch_operands = 2 : i64, tpu.core_type = #tpu.core_type<tc>, window_params = [{pipeline_mode = #tpu.pipeline_mode<synchronous>, transform_indices = @transform_0, window_bounds = array<i64: 8, 1>}, {pipeline_mode = #tpu.pipeline_mode<synchronous>, transform_indices = @transform_1, window_bounds = array<i64: 1, 8>}, {transform_indices = @transform_2, window_bounds = array<i64: 8, 256>}, {transform_indices = @transform_3, window_bounds = array<i64: 8, 256>}, {transform_indices = @transform_4, window_bounds = array<i64: 1, 1>}, {transform_indices = @transform_5, window_bounds = array<i64: 1, 1>}]} {
    %c0_i32 = arith.constant 0 : i32
    %0 = arith.cmpi eq, %arg0, %c0_i32 : i32
    %1 = arith.extui %0 : i1 to i32
    %c0_i32_0 = arith.constant 0 : i32
    %2 = arith.cmpi ne, %1, %c0_i32_0 : i32
    scf.if %2 {
      %cst_8 = arith.constant 0.000000e+00 : f32
      %18 = vector.broadcast %cst_8 : f32 to vector<8x1xf32>
      %c0_9 = arith.constant 0 : index
      %c0_10 = arith.constant 0 : index
      %19 = vector.load %arg7[%c0_9, %c0_10] : memref<8x1xf32, #tpu.memory_space<vmem>>, vector<8x1xf32>
      tpu.vector_store %arg7[%c0_9, %c0_10], %18 {strides = array<i32>} : memref<8x1xf32, #tpu.memory_space<vmem>>, vector<8x1xf32>,
    } else {
    }
    %c0 = arith.constant 0 : index
    %c0_1 = arith.constant 0 : index
    %3 = vector.load %arg3[%c0, %c0_1] : memref<8x256xf32, #tpu.memory_space<vmem>>, vector<8x256xf32>
    %c0_2 = arith.constant 0 : index
    %c0_3 = arith.constant 0 : index
    %4 = vector.load %arg4[%c0_2, %c0_3] : memref<8x256xf32, #tpu.memory_space<vmem>>, vector<8x256xf32>
    %5 = arith.subf %3, %4 : vector<8x256xf32>
    %6 = arith.mulf %5, %5 : vector<8x256xf32>
    %cst = arith.constant dense<0.000000e+00> : vector<8xf32>
    %7 = vector.multi_reduction <add>, %6, %cst [1] : vector<8x256xf32> to vector<8xf32>
    %8 = vector.shape_cast %7 : vector<8xf32> to vector<8x1xf32>
    %cst_4 = arith.constant 3.906250e-03 : f32
    %9 = vector.broadcast %cst_4 : f32 to vector<8x1xf32>
    %10 = arith.mulf %8, %9 : vector<8x1xf32>
    %c8_i32 = arith.constant 8 : i32
    %11 = arith.muli %arg0, %c8_i32 : i32
    %12 = tpu.assume_multiple %11, 8 : i32
    %13 = arith.index_cast %12 : i32 to index
    %c0_5 = arith.constant 0 : index
    %14 = vector.load %arg7[%13, %c0_5] : memref<8x1xf32, #tpu.memory_space<vmem>>, vector<8x1xf32>
    tpu.vector_store %arg7[%13, %c0_5], %10 {strides = array<i32>} : memref<8x1xf32, #tpu.memory_space<vmem>>, vector<8x1xf32>,
    %c0_i32_6 = arith.constant 0 : i32
    %15 = arith.cmpi eq, %arg0, %c0_i32_6 : i32
    %16 = arith.extui %15 : i1 to i32
    %c0_i32_7 = arith.constant 0 : i32
    %17 = arith.cmpi ne, %16, %c0_i32_7 : i32
    scf.if %17 {
      %c0_8 = arith.constant 0 : index
      %c0_9 = arith.constant 0 : index
      %18 = vector.load %arg7[%c0_8, %c0_9] : memref<8x1xf32, #tpu.memory_space<vmem>>, vector<8x1xf32>
      %19 = vector.shape_cast %18 : vector<8x1xf32> to vector<1x8x1xf32>
      %cst_10 = arith.constant dense<0.000000e+00> : vector<1xf32>
      %20 = vector.multi_reduction <add>, %19, %cst_10 [1, 2] : vector<1x8x1xf32> to vector<1xf32>
      %21 = vector.shape_cast %20 : vector<1xf32> to vector<1x1x1xf32>
      %22 = vector.extract %21[0, 0, 0] : f32 from vector<1x1x1xf32>
      %c0_11 = arith.constant 0 : index
      %c0_12 = arith.constant 0 : index
      %23 = memref.load %arg6[%c0_11, %c0_12] : memref<1x1xf32, #tpu.memory_space<smem>>
      memref.store %22, %arg6[%c0_11, %c0_12] : memref<1x1xf32, #tpu.memory_space<smem>>
      %24 = tpu.iota {dimensions = array<i32: 0>} : vector<8x8xi32>
      %25 = tpu.iota {dimensions = array<i32: 1>} : vector<8x8xi32>
      %26 = arith.cmpi eq, %24, %25 : vector<8x8xi32>
      %27 = arith.extui %26 : vector<8x8xi1> to vector<8x8xi32>
      %28 = arith.sitofp %27 : vector<8x8xi32> to vector<8x8xf32>
      %c0_13 = arith.constant 0 : index
      %c0_14 = arith.constant 0 : index
      %29 = vector.load %arg7[%c0_13, %c0_14] : memref<8x1xf32, #tpu.memory_space<vmem>>, vector<8x1xf32>
      %30 = vector.broadcast %29 : vector<8x1xf32> to vector<8x8xf32>
      %31 = arith.mulf %28, %30 : vector<8x8xf32>
      %cst_15 = arith.constant dense<0.000000e+00> : vector<8xf32>
      %32 = vector.multi_reduction <add>, %31, %cst_15 [0] : vector<8x8xf32> to vector<8xf32>
      %33 = vector.shape_cast %32 : vector<8xf32> to vector<1x8xf32>
      %c0_16 = arith.constant 0 : index
      %c0_17 = arith.constant 0 : index
      %34 = vector.load %arg8[%c0_16, %c0_17] : memref<1x8xf32, #tpu.memory_space<vmem>>, vector<1x8xf32>
      tpu.vector_store %arg8[%c0_16, %c0_17], %33 {strides = array<i32>} : memref<1x8xf32, #tpu.memory_space<vmem>>, vector<1x8xf32>,
      %c0_18 = arith.constant 0 : index
      %c0_19 = arith.constant 0 : index
      %35 = vector.load %arg8[%c0_18, %c0_19] : memref<1x8xf32, #tpu.memory_space<vmem>>, vector<1x8xf32>
      %c0_20 = arith.constant 0 : index
      %c0_21 = arith.constant 0 : index
      %36 = vector.load %arg2[%c0_20, %c0_21] : memref<1x8xi32, #tpu.memory_space<vmem>>, vector<1x8xi32>
      %c1_i32 = arith.constant 1 : i32
      %37 = vector.broadcast %c1_i32 : i32 to vector<1x8xi32>
      %38 = arith.cmpi eq, %36, %37 : vector<1x8xi32>
      %cst_22 = arith.constant 0.000000e+00 : f32
      %c0_i32_23 = arith.constant 0 : i32
      %c8_i32_24 = arith.constant 8 : i32
      %39 = arith.muli %c0_i32_23, %c8_i32_24 : i32
      %40 = tpu.assume_multiple %39, 8 : i32
      %41 = arith.index_cast %40 : i32 to index
      %c0_25 = arith.constant 0 : index
      %42 = vector.load %arg7[%41, %c0_25] : memref<8x1xf32, #tpu.memory_space<vmem>>, vector<8x1xf32>
      %43 = arith.index_cast %40 : i32 to index
      %c0_26 = arith.constant 0 : index
      %44 = vector.load %arg1[%43, %c0_26] : memref<8x1xi32, #tpu.memory_space<vmem>>, vector<8x1xi32>
      %c1_i32_27 = arith.constant 1 : i32
      %45 = vector.broadcast %c1_i32_27 : i32 to vector<8x1xi32>
      %46 = arith.cmpi sgt, %44, %45 : vector<8x1xi32>
      %47 = vector.broadcast %42 : vector<8x1xf32> to vector<8x8xf32>
      %48 = vector.broadcast %35 : vector<1x8xf32> to vector<8x8xf32>
      %49 = arith.subf %47, %48 : vector<8x8xf32>
      %cst_28 = arith.constant 5.000000e-01 : f32
      %50 = vector.broadcast %cst_28 : f32 to vector<8x8xf32>
      %51 = arith.mulf %50, %49 : vector<8x8xf32>
      %52 = math.tanh %51 : vector<8x8xf32>
      %cst_29 = arith.constant 1.000000e+00 : f32
      %53 = vector.broadcast %cst_29 : f32 to vector<8x8xf32>
      %54 = arith.addf %52, %53 : vector<8x8xf32>
      %cst_30 = arith.constant 5.000000e-01 : f32
      %55 = vector.broadcast %cst_30 : f32 to vector<8x8xf32>
      %56 = arith.mulf %55, %54 : vector<8x8xf32>
      %57 = vector.broadcast %46 : vector<8x1xi1> to vector<8x8xi1>
      %58 = vector.broadcast %38 : vector<1x8xi1> to vector<8x8xi1>
      %59 = arith.andi %57, %58 : vector<8x8xi1>
      %cst_31 = arith.constant 0.000000e+00 : f32
      %60 = vector.broadcast %cst_31 : f32 to vector<8x8xf32>
      %61 = arith.select %59, %56, %60 : vector<8x8xi1>, vector<8x8xf32>
      %62 = vector.shape_cast %61 : vector<8x8xf32> to vector<1x8x8xf32>
      %cst_32 = arith.constant dense<0.000000e+00> : vector<1xf32>
      %63 = vector.multi_reduction <add>, %62, %cst_32 [1, 2] : vector<1x8x8xf32> to vector<1xf32>
      %64 = vector.shape_cast %63 : vector<1xf32> to vector<1x1x1xf32>
      %65 = vector.extract %64[0, 0, 0] : f32 from vector<1x1x1xf32>
      %66 = arith.addf %cst_22, %65 : f32
      %c1_i32_33 = arith.constant 1 : i32
      %c0_34 = arith.constant 0 : index
      %c0_35 = arith.constant 0 : index
      %67 = memref.load %arg5[%c0_34, %c0_35] : memref<1x1xf32, #tpu.memory_space<smem>>
      memref.store %66, %arg5[%c0_34, %c0_35] : memref<1x1xf32, #tpu.memory_space<smem>>
    } else {
    }
    return
  }
  func.func @transform_0(%arg0: i32) -> (i32, i32) {
    %c0_i32 = arith.constant 0 : i32
    %c0_i32_0 = arith.constant 0 : i32
    %c0_i32_1 = arith.constant 0 : i32
    return %c0_i32, %c0_i32_0 : i32, i32
  }
  func.func @transform_1(%arg0: i32) -> (i32, i32) {
    %c0_i32 = arith.constant 0 : i32
    %c0_i32_0 = arith.constant 0 : i32
    %c0_i32_1 = arith.constant 0 : i32
    return %c0_i32, %c0_i32_0 : i32, i32
  }
  func.func @transform_2(%arg0: i32) -> (i32, i32) {
    %c0_i32 = arith.constant 0 : i32
    %c0_i32_0 = arith.constant 0 : i32
    return %arg0, %c0_i32 : i32, i32
  }
  func.func @transform_3(%arg0: i32) -> (i32, i32) {
    %c0_i32 = arith.constant 0 : i32
    %c0_i32_0 = arith.constant 0 : i32
    return %arg0, %c0_i32 : i32, i32
  }
  func.func @transform_4(%arg0: i32) -> (i32, i32) {
    %c0_i32 = arith.constant 0 : i32
    %c0_i32_0 = arith.constant 0 : i32
    %c0_i32_1 = arith.constant 0 : i32
    return %c0_i32, %c0_i32_0 : i32, i32
  }
  func.func @transform_5(%arg0: i32) -> (i32, i32) {
    %c0_i32 = arith.constant 0 : i32
    %c0_i32_0 = arith.constant 0 : i32
    %c0_i32_1 = arith.constant 0 : i32
    return %c0_i32, %c0_i32_0 : i32, i32
  }
}

</mosaic_0001>

<llo_original>
// kernel: device_fn.1
$region0: #{device_fn.1}
  #allocation0 [shape = 'u32[]', space=smem, size = 0x4, offset = 0x4, fixed_abs, tag = 'smem constant byte address 0x4 - core index']
  #allocation1 [shape = 'u32[144,128]{1,0:T(1,128)}', space=vmem, size = 0x12000, scoped, tag = 'internal scratch']
  #allocation2 [shape = 'f32[8,1]{1,0:T(8,128)}', space=vmem, size = 0x1000, scoped, tag = 'scratch operand']
  #allocation3 [shape = 'f32[1,8]{1,0:T(1,128)}', space=vmem, size = 0x200, scoped, tag = 'scratch operand']
  %s0 = inlined_call_operand.vmem [shape: s32[8,1], index: 0, kind: input, shape index: {}]
  %s1 = inlined_call_operand.vmem [shape: s32[1,8], index: 1, kind: input, shape index: {}]
  %s2 = inlined_call_operand.vmem [shape: f32[8,256], index: 2, kind: input, shape index: {}]
  %s3 = inlined_call_operand.vmem [shape: f32[8,256], index: 3, kind: input, shape index: {}]
  %s4 = inlined_call_operand.hbm [shape: f32[1,1], index: 4, kind: output, shape index: {0}]
  %s5 = inlined_call_operand.hbm [shape: f32[1,1], index: 5, kind: output, shape index: {1}]
  %6 = xla_tuple %s4, %s5
  %s7 = sld [smem:[#allocation0]]
  $region42: #{device_fn.1} parent=0
    _
  %s9 = ssub.s32 1, %s7
  %s10 = scalar_select 0, %s9, %s7
  $region1: #{device_fn.1} parent=0
    #allocation4 [shape = 'u8[512]{0}', space=smem, size = 0x200, scoped, tag = 'output window, operand 0, single buffered']
    #allocation5 [shape = 's32[1]{0}', space=sflag, size = 0x4, scoped, tag = 'scoped memory for device_fn.1']
    #allocation6 [shape = 'u8[512]{0}', space=smem, size = 0x200, scoped, tag = 'output window, operand 1, single buffered']
    #allocation7 [shape = 's32[1]{0}', space=sflag, size = 0x4, scoped, tag = 'scoped memory for device_fn.1']
    %11 = vsyncpa [#allocation5], 0
    %12 = vsyncpa [#allocation7], 0
    // Predicated region
    $region2: #{device_fn.1} parent=1 // pred_check
      _
    $region3: #{device_fn.1} parent=1 // pred_check_branch
      %14 = sbr.rel (0) target = $region5
    $region4: #{device_fn.1} parent=1 // pred_region
      _
    $region5: #{device_fn.1} parent=1 // pred_fallthru
      _
    // Predicated region
    $region6: #{device_fn.1} parent=1 // pred_check
      _
    $region7: #{device_fn.1} parent=1 // pred_check_branch
      %16 = sbr.rel (0) target = $region9
    $region8: #{device_fn.1} parent=1 // pred_region
      _
    $region9: #{device_fn.1} parent=1 // pred_fallthru
      _
    // Predicated region
    $region10: #{device_fn.1} parent=1 // pred_check
      _
    $region11: #{device_fn.1} parent=1 // pred_check_branch
      %18 = sbr.rel (0) target = $region13
    $region12: #{device_fn.1} parent=1 // pred_region
      _
    $region13: #{device_fn.1} parent=1 // pred_fallthru
      _
    // Predicated region
    $region14: #{device_fn.1} parent=1 // pred_check
      _
    $region15: #{device_fn.1} parent=1 // pred_check_branch
      %20 = sbr.rel (0) target = $region17
    $region16: #{device_fn.1} parent=1 // pred_region
      _
    $region17: #{device_fn.1} parent=1 // pred_fallthru
      _
    %p21 = scmp.eq.s32.totalorder 0, 0
    // Predicated region
    $region18: #{device_fn.1} parent=1 // pred_check
      %p22 = pneg %p21
    $region19: #{device_fn.1} parent=1 // pred_check_branch
      %24 = sbr.rel (%p22) target = $region21
    $region20: #{device_fn.1} parent=1 // pred_region
      %vm25 = vcmask 7168
      %26 = vst.msk [vmem:[#allocation2] sm:$0xff] %vm25, 0.0
    $region21: #{device_fn.1} parent=1 // pred_fallthru
      _
    %v27 = vld [vmem:[%s2] sm:$0xff]
    %v28 = vld [vmem:[%s2 + $0x8] sm:$0xff]
    %v29 = vld [vmem:[%s3] sm:$0xff]
    %v30 = vld [vmem:[%s3 + $0x8] sm:$0xff]
    %v31 = vsub.f32 %v27, %v29
    %v32 = vsub.f32 %v28, %v30
    %v33 = vmul.f32 %v31, %v31
    %v34 = vmul.f32 %v32, %v32
    %v35 = vadd.f32 %v33, %v34
    %36 = vadd.xlane.f32.xlu0 %v35
    %v37 = vpop.xlane.xlu0 %36
    %v38 = vmul.f32 %v37, 0.00390625
    %s39 = smul.u32 0, 8
    %s40 = scalar_lea.vmem [#allocation2], %s39
    %vm41 = vcmask 7168
    %42 = vst.msk [vmem:[%s40] sm:$0xff] %vm41, %v38
    // Predicated region
    $region22: #{device_fn.1} parent=1 // pred_check
      %p43 = pneg %p21
    $region23: #{device_fn.1} parent=1 // pred_check_branch
      %45 = sbr.rel (%p43) target = $region25
    $region24: #{device_fn.1} parent=1 // pred_region
      %v46 = vld [vmem:[#allocation2] sm:$0xff]
      %v47 = vsel %vm41, %v46, 0.0
      %48 = vadd.xlane.f32.xlu0 %v47
      %v49 = vpop.xlane.xlu0 %48
      %v50 = vrot.slane %v49, 4
      %v51 = vadd.f32 %v49, %v50
      %v52 = vrot.slane %v51, 2
      %v53 = vadd.f32 %v51, %v52
      %v54 = vrot.slane %v53, 1
      %v55 = vadd.f32 %v53, %v54
      %s56 = vtos %v55
      %s57 = scalar_lea.smem [#allocation6], 0
      %58 = sst [smem:[%s57]] %s56
      %v59 = vlaneseq
      %v60 = vshrl.u32 %v59, 7
      %v61 = vlaneseq
      %v62 = vand.u32 %v61, 127
      %vm63 = vcmp.eq.s32.totalorder %v60, %v62
      %v64 = vsel %vm63, 1, 0
      %v65 = vcvt.s32.f32 %v64
      %v66 = vld [vmem:[#allocation2] sm:$0xff]
      %68 = vset.pattern.permute.xlu0 0
      %69 = vperm.xlu0 %68, %v66
      %v70 = vpop.permute.xlu0 %69
      %v72 = vmul.f32 %v65, %v70
      %vm73 = vcmask 64512
      %v74 = vsel %vm73, %v72, 0.0
      %v75 = vrot.slane %v74, 4
      %v76 = vadd.f32 %v74, %v75
      %v77 = vrot.slane %v76, 2
      %v78 = vadd.f32 %v76, %v77
      %v79 = vrot.slane %v78, 1
      %v80 = vadd.f32 %v78, %v79
      %vm81 = vcmask 57344
      %82 = vst.msk [vmem:[#allocation3] sm:$0x1] %vm81, %v80
      %v83 = vld [vmem:[#allocation3] sm:$0x1]
      %v84 = vld [vmem:[%s1] sm:$0x1]
      %vm85 = vcmp.eq.s32.totalorder %v84, 1
      %v86 = vld [vmem:[#allocation2] sm:$0xff]
      %v87 = vld [vmem:[%s0] sm:$0xff]
      %vm88 = vcmp.gt.s32.totalorder %v87, 1
      %90 = vset.pattern.permute.xlu0 0
      %91 = vperm.xlu0 %90, %v86
      %v92 = vpop.permute.xlu0 %91
      %v95 = vlaneseq
      %v96 = vshrl.u32 %v95, 7
      %v97 = vsub.s32 0, %v96
      %v98 = vrot.slane %v83, %v97
      %v100 = vsub.f32 %v92, %v98
      %v101 = vmul.f32 %v100, 0.5
      %v102 = vtanh.pop %v101
      %v103 = vadd.f32 %v102, 1.0
      %v104 = vmul.f32 %v103, 0.5
      %v105 = vsel %vm88, 1, 0
      %106 = vset.pattern.permute.xlu0 0
      %107 = vperm.xlu0 %106, %v105
      %v108 = vpop.permute.xlu0 %107
      %vm109 = vcmp.eq.s32.totalorder %v108, 1
      %v110 = vsel %vm85, 1, 0
      %v111 = vlaneseq
      %v112 = vshrl.u32 %v111, 7
      %v113 = vsub.s32 0, %v112
      %v114 = vrot.slane %v110, %v113
      %vm115 = vcmp.eq.s32.totalorder %v114, 1
      %vm116 = vmand %vm109, %vm115
      %v117 = vsel %vm116, %v104, 0.0
      %v118 = vsel %vm73, %v117, 0.0
      %119 = vadd.xlane.f32.xlu0 %v118
      %v120 = vpop.xlane.xlu0 %119
      %v121 = vrot.slane %v120, 4
      %v122 = vadd.f32 %v120, %v121
      %v123 = vrot.slane %v122, 2
      %v124 = vadd.f32 %v122, %v123
      %v125 = vrot.slane %v124, 1
      %v126 = vadd.f32 %v124, %v125
      %s127 = vtos %v126
      %s128 = sadd.f32 %s127, 0.0
      %s129 = scalar_lea.smem [#allocation4], 0
      %130 = sst [smem:[%s129]] %s128
    $region25: #{device_fn.1} parent=1 // pred_fallthru
      _
    // Predicated region
    $region26: #{device_fn.1} parent=1 // pred_check
      _
    $region27: #{device_fn.1} parent=1 // pred_check_branch
      %132 = sbr.rel (0) target = $region29
    $region28: #{device_fn.1} parent=1 // pred_region
      %s134 = ssub.s32 16, 16
      %135 = vsyncadd [#allocation5], %s134
      %138 = dma.smem_to_hbm [#allocation4], 16, %s4, [#allocation5]
    $region29: #{device_fn.1} parent=1 // pred_fallthru
      _
    // Predicated region
    $region30: #{device_fn.1} parent=1 // pred_check
      _
    $region31: #{device_fn.1} parent=1 // pred_check_branch
      %140 = sbr.rel (0) target = $region33
    $region32: #{device_fn.1} parent=1 // pred_region
      %s142 = ssub.s32 16, 16
      %143 = vsyncadd [#allocation7], %s142
      %146 = dma.smem_to_hbm [#allocation6], 16, %s5, [#allocation7]
    $region33: #{device_fn.1} parent=1 // pred_fallthru
      _
    // Predicated region
    $region34: #{device_fn.1} parent=1 // pred_check
      _
    $region35: #{device_fn.1} parent=1 // pred_check_branch
      %148 = sbr.rel (0) target = $region37
    $region36: #{device_fn.1} parent=1 // pred_region
      %149 = dma.done [#allocation5], 16
    $region37: #{device_fn.1} parent=1 // pred_fallthru
      _
    // Predicated region
    $region38: #{device_fn.1} parent=1 // pred_check
      _
    $region39: #{device_fn.1} parent=1 // pred_check_branch
      %151 = sbr.rel (0) target = $region41
    $region40: #{device_fn.1} parent=1 // pred_region
      %152 = dma.done [#allocation7], 16
    $region41: #{device_fn.1} parent=1 // pred_fallthru
      _
    %153 = sfence
    %154 = vsyncpa [#allocation5], 1
    %155 = vsyncpa [#allocation7], 1

</llo_original>
